<compile_context>
chip_gen: v6e
topology: v6e:2x2x1
jax: 0.10.0
libtpu: 0.0.40
codegen_flags: <defaults>
</compile_context>

<pallas_src>
import math
import functools

import jax
import jax.numpy as jnp
from jax.experimental import pallas as pl
from jax.experimental.pallas import tpu as pltpu


def _cdiv(a: int, b: int) -> int:
    return -(-a // b)


# ----------------------------------------------------------------------------
# Kernels
# ----------------------------------------------------------------------------
def _pe_add_kernel(x_ref, pe_ref, o_ref):
    # x_ref: (tile_rows, tile_w); pe_ref: (1, tile_w) broadcast over rows.
    o_ref[...] = (x_ref[...] + pe_ref[...]).astype(o_ref.dtype)


def _pe_add_dropout_kernel(seed_ref, x_ref, pe_ref, o_ref, *, p):
    # seed_ref: SMEM scalar-prefetch, shape (1,), int32.
    y = x_ref[...] + pe_ref[...]

    # Per-tile decorrelated seed (prime mixing; int32 wraparound is fine).
    mixed = (seed_ref[0] * jnp.int32(1000003)
             + pl.program_id(0) * jnp.int32(7919)
             + pl.program_id(1))
    pltpu.prng_seed(mixed)
    bits = pltpu.prng_random_bits(y.shape)
    u = pltpu.bitcast(bits, jnp.uint32)

    # Inverted dropout: keep with prob (1-p), scale kept values by 1/(1-p),
    # single fused select. (On v7x with bf16 inputs one could halve PRNG volume
    # by comparing both 16-bit halves of each uint32; not needed at f32.)
    thresh = jnp.uint32(min(int(round(p * 4294967296.0)), 4294967295))
    inv_keep = jnp.asarray(1.0 / (1.0 - p), dtype=y.dtype)
    o_ref[...] = jnp.where(u >= thresh, y * inv_keep, 0).astype(o_ref.dtype)


# ----------------------------------------------------------------------------
# Parameter construction (deterministic, mirrors nn.Module __init__)
# ----------------------------------------------------------------------------
def make_pe_buffer(d_model: int, max_len: int = 5000) -> jnp.ndarray:
    position = jnp.arange(max_len, dtype=jnp.float32)[:, None]            # [max_len, 1]
    div_term = jnp.exp(
        jnp.arange(0, d_model, 2, dtype=jnp.float32) * (-math.log(10000.0) / d_model)
    )                                                                      # [d_model/2]
    pe = jnp.zeros((max_len, 1, d_model), dtype=jnp.float32)
    pe = pe.at[:, 0, 0::2].set(jnp.sin(position * div_term))
    pe = pe.at[:, 0, 1::2].set(jnp.cos(position * div_term))
    return pe


# ----------------------------------------------------------------------------
# Generation-aware VMEM / tile budgets
# ----------------------------------------------------------------------------
def _vmem_params(target_tile_bytes=None):
    """Return (target_tile_bytes, vmem_limit_bytes) sized for the current chip."""
    try:
        info = pltpu.get_tpu_info()
        vmem_bytes = int(getattr(info, "vmem_capacity_bytes", 64 << 20))
    except Exception:
        vmem_bytes = 64 << 20           # unknown backend: assume tightest VMEM (v7x)
    if vmem_bytes >= (100 << 20):       # v5e / v6e: 128 MiB VMEM
        tgt, limit = 16 << 20, 96 << 20
    else:                               # v7x: 64 MiB VMEM per TensorCore
        tgt, limit = 8 << 20, 48 << 20
    if target_tile_bytes is not None:
        tgt = int(target_tile_bytes)
    return tgt, limit


def _choose_tiles(S: int, W: int, itemsize: int, target_tile_bytes: int):
    """Pick (tile_rows, tile_w) for the lane-dense [S, W] slab.

    Invariant: tile_rows * tile_w * itemsize <= target_tile_bytes, so
    double-buffered x + out (4x tile) + the resident pe row stays well
    inside the scoped vmem limit on every generation.
    """
    row_bytes = W * itemsize
    if 8 * row_bytes <= target_tile_bytes or W <= 128:
        tile_w = W                                     # full width: pe row resident
    else:
        # A single 8-row full-width tile would blow the budget -> tile the lane
        # axis too, in multiples of 128 (unmasked vst), sized so 8 rows ~= target.
        tile_w = max(128, (target_tile_bytes // (8 * itemsize)) // 128 * 128)
        tile_w = min(tile_w, W)

    budget_rows = max(1, target_tile_bytes // max(tile_w * itemsize, 1))
    if budget_rows >= S:
        tile_rows = S
    else:
        tile_rows = max(8, (budget_rows // 8) * 8)     # sublane multiple when < full

    # Keep >= ~8 grid steps over the row axis for medium/large slabs so both
    # v7x TensorCores get work and DMA-in / compute / DMA-out actually overlap.
    # (Skip for tiny slabs where per-step overhead (~0.35 us) would dominate.)
    slab_bytes = S * W * itemsize
    if S >= 16 and slab_bytes >= (2 << 20):
        row_cap = max(8, ((_cdiv(S, 8) + 7) // 8) * 8)
        tile_rows = min(tile_rows, row_cap)

    return tile_rows, tile_w


# ----------------------------------------------------------------------------
# Wrapper calling pallas_call
# ----------------------------------------------------------------------------
def positional_encoding_forward(
    x: jnp.ndarray,            # [seq_len, batch, d_model]
    pe: jnp.ndarray,           # [max_len, 1, d_model]
    *,
    dropout_p: float = 0.1,
    training: bool = False,
    seed: int = 0,
    target_tile_bytes=None,    # None -> generation-aware default
) -> jnp.ndarray:
    S, B, D = x.shape
    assert B <= pe.shape[0], "batch must be <= max_len (module slices pe[:batch])"
    W = B * D

    # PyTorch: x + pe[:x.size(1)].permute(1, 0, 2)  ->  [1, B, D] broadcast over seq.
    # Lane-dense 2D views: x2d[s, b*D + d] = x[s, b, d]; pe_row[0, b*D + d] = pe[b, 0, d].
    x2d = x.reshape(S, W)
    pe_row = pe[:B, 0, :].reshape(1, W).astype(x.dtype)   # pre-cast: no per-elem promote

    tgt_bytes, vmem_limit = _vmem_params(target_tile_bytes)
    tile_rows, tile_w = _choose_tiles(S, W, x.dtype.itemsize, tgt_bytes)
    grid = (_cdiv(S, tile_rows), _cdiv(W, tile_w))        # partial tail blocks masked

    compiler_params = pltpu.CompilerParams(
        dimension_semantics=("parallel", "parallel"),     # shard tiles across TCs (v7x)
        vmem_limit_bytes=vmem_limit,                      # raise scoped limit, keep headroom
    )
    out_shape = jax.ShapeDtypeStruct((S, W), x.dtype)
    cost = pl.CostEstimate(                               # advertise as bandwidth-bound
        flops=S * W,
        transcendentals=0,
        bytes_accessed=2 * S * W * x.dtype.itemsize + W * x.dtype.itemsize,
    )

    if training and dropout_p > 0.0:
        kernel = functools.partial(_pe_add_dropout_kernel, p=float(dropout_p))
        grid_spec = pltpu.PrefetchScalarGridSpec(
            num_scalar_prefetch=1,
            grid=grid,
            in_specs=[
                pl.BlockSpec((tile_rows, tile_w), lambda s, w, seed_ref: (s, w)),  # x
                pl.BlockSpec((1, tile_w), lambda s, w, seed_ref: (0, w)),          # pe (resident)
            ],
            out_specs=pl.BlockSpec((tile_rows, tile_w), lambda s, w, seed_ref: (s, w)),
        )
        seed_arr = jnp.array([seed], dtype=jnp.int32)
        out2d = pl.pallas_call(
            kernel,
            out_shape=out_shape,
            grid_spec=grid_spec,
            compiler_params=compiler_params,
            cost_estimate=cost,
            input_output_aliases={1: 0},   # x2d (operand 1 after the seed) -> out, in-place
        )(seed_arr, x2d, pe_row)
    else:
        # Eval mode: no scalar prefetch, no dropout, donate x's buffer to the output.
        grid_spec = pltpu.PrefetchScalarGridSpec(
            num_scalar_prefetch=0,
            grid=grid,
            in_specs=[
                pl.BlockSpec((tile_rows, tile_w), lambda s, w: (s, w)),            # x
                pl.BlockSpec((1, tile_w), lambda s, w: (0, w)),                    # pe (resident)
            ],
            out_specs=pl.BlockSpec((tile_rows, tile_w), lambda s, w: (s, w)),
        )
        out2d = pl.pallas_call(
            _pe_add_kernel,
            out_shape=out_shape,
            grid_spec=grid_spec,
            compiler_params=compiler_params,
            cost_estimate=cost,
            input_output_aliases={0: 0},   # in-place streaming add (x -> out)
        )(x2d, pe_row)

    return out2d.reshape(S, B, D)


# ----------------------------------------------------------------------------
# Main: build deterministic inputs, run, verify vs pure-JAX reference
# ----------------------------------------------------------------------------
if __name__ == "__main__":
    seq_len, batch, d_model = 8, 2, 32
    max_len = 64
    dropout_p = 0.1

    key = jax.random.PRNGKey(0)
    x = jax.random.normal(key, (seq_len, batch, d_model), dtype=jnp.float32)
    pe = make_pe_buffer(d_model, max_len)

    # Pure-JAX reference of the PyTorch forward (eval mode: dropout = identity).
    ref = x + jnp.transpose(pe[:batch], (1, 0, 2))      # [1, B, D] broadcast over seq

    out = positional_encoding_forward(x, pe, dropout_p=dropout_p, training=False)
    out = jax.block_until_ready(out)
    assert out.shape == (seq_len, batch, d_model)
    assert jnp.allclose(out, ref, atol=1e-6), "eval mismatch vs reference"

    # Training-mode dropout uses the TPU hardware PRNG (pltpu.prng_seed /
    # prng_random_bits), which has no CPU / generic-interpret lowering, so only
    # exercise it when the default backend is a real TPU.
    # TODO(synk): TPU hardware PRNG cannot reproduce torch's dropout RNG stream bit-for-bit.
    if jax.default_backend() == "tpu":
        out_tr = positional_encoding_forward(
            x, pe, dropout_p=dropout_p, training=True, seed=123
        )
        out_tr = jax.block_until_ready(out_tr)
        scaled = ref / (1.0 - dropout_p)
        ok = jnp.all((out_tr == 0) | jnp.isclose(out_tr, scaled, atol=1e-5))
        assert bool(ok), "training-mode dropout values inconsistent with reference"

    print("KERNEL_OK")
</pallas_src>

<mosaic_0001>
module attributes {stable_mosaic.version = 11 : i64} {
  func.func @_pe_add_kernel(%arg0: i32, %arg1: i32, %arg2: memref<8x64xf32, #tpu.memory_space<vmem>>, %arg3: memref<1x64xf32, #tpu.memory_space<vmem>>, %arg4: memref<8x64xf32, #tpu.memory_space<vmem>>) attributes {dimension_semantics = [#tpu.dimension_semantics<parallel>, #tpu.dimension_semantics<parallel>], iteration_bounds = array<i64: 1, 1>, scalar_prefetch = 0 : i64, scratch_operands = 0 : i64, tpu.core_type = #tpu.core_type<tc>, window_params = [{transform_indices = @transform_0, window_bounds = array<i64: 8, 64>}, {transform_indices = @transform_1, window_bounds = array<i64: 1, 64>}, {transform_indices = @transform_2, window_bounds = array<i64: 8, 64>}]} {
    %c0 = arith.constant 0 : index
    %c0_0 = arith.constant 0 : index
    %0 = vector.load %arg2[%c0, %c0_0] : memref<8x64xf32, #tpu.memory_space<vmem>>, vector<8x64xf32>
    %c0_1 = arith.constant 0 : index
    %c0_2 = arith.constant 0 : index
    %1 = vector.load %arg3[%c0_1, %c0_2] : memref<1x64xf32, #tpu.memory_space<vmem>>, vector<1x64xf32>
    %2 = vector.broadcast %1 : vector<1x64xf32> to vector<8x64xf32>
    %3 = arith.addf %0, %2 : vector<8x64xf32>
    %c0_3 = arith.constant 0 : index
    %c0_4 = arith.constant 0 : index
    %4 = vector.load %arg4[%c0_3, %c0_4] : memref<8x64xf32, #tpu.memory_space<vmem>>, vector<8x64xf32>
    tpu.vector_store %arg4[%c0_3, %c0_4], %3 {strides = array<i32>} : memref<8x64xf32, #tpu.memory_space<vmem>>, vector<8x64xf32>,
    return
  }
  func.func @transform_0(%arg0: i32, %arg1: i32) -> (i32, i32) {
    %c0_i32 = arith.constant 0 : i32
    return %arg0, %arg1 : i32, i32
  }
  func.func @transform_1(%arg0: i32, %arg1: i32) -> (i32, i32) {
    %c0_i32 = arith.constant 0 : i32
    %c0_i32_0 = arith.constant 0 : i32
    return %c0_i32, %arg1 : i32, i32
  }
  func.func @transform_2(%arg0: i32, %arg1: i32) -> (i32, i32) {
    %c0_i32 = arith.constant 0 : i32
    return %arg0, %arg1 : i32, i32
  }
}

</mosaic_0001>

<llo_original>
// kernel: tpu_custom_call.1
$region0: #{tpu_custom_call.1}
  #allocation0 [shape = 'u32[]', space=smem, size = 0x4, offset = 0x4, fixed_abs, tag = 'smem constant byte address 0x4 - core index']
  #allocation1 [shape = 'u32[144,128]{1,0:T(1,128)}', space=vmem, size = 0x12000, scoped, tag = 'internal scratch']
  %s0 = inlined_call_operand.hbm [shape: f32[8,64], index: 0, kind: input, shape index: {}, may-alias: {0,2}]
  %s1 = inlined_call_operand.vmem [shape: f32[1,64], index: 1, kind: input, shape index: {}]
  %s2 = inlined_call_operand.hbm [shape: f32[8,64], index: 2, kind: output, shape index: {}, may-alias: {0,2}]
  %s3 = sld [smem:[#allocation0]]
  $region22: #{tpu_custom_call.1} parent=0
    _
  %s5 = ssub.s32 1, %s3
  %s6 = scalar_select 0, %s5, %s3
  $region1: #{tpu_custom_call.1} parent=0
    #allocation2 [shape = 'u8[4096]{0}', space=vmem, size = 0x1000, scoped, tag = 'input window, operand 0, single buffered']
    #allocation3 [shape = 's32[1]{0}', space=sflag, size = 0x4, scoped, tag = 'scoped memory for tpu_custom_call.1']
    #allocation4 [shape = 's32[1]{0}', space=sflag, size = 0x4, scoped, tag = 'scoped memory for tpu_custom_call.1']
    #allocation5 [shape = 'u8[4096]{0}', space=vmem, size = 0x1000, scoped, tag = 'output window, operand 0, single buffered']
    %7 = vsyncpa [#allocation3], 0
    %8 = vsyncpa [#allocation4], 0
    // Predicated region
    $region2: #{tpu_custom_call.1} parent=1 // pred_check
      _
    $region3: #{tpu_custom_call.1} parent=1 // pred_check_branch
      %10 = sbr.rel (0) target = $region5
    $region4: #{tpu_custom_call.1} parent=1 // pred_region
      %s12 = ssub.s32 128, 128
      %13 = vsyncadd [#allocation3], %s12
      %s15 = sshll.u32 [#allocation2], 4
      %s16 = int_to_ptr.vmem [resolvable:$true] %s15
      %18 = dma.hbm_to_vmem [thread:$0]  %s0, 128, %s16, [#allocation3]
    $region5: #{tpu_custom_call.1} parent=1 // pred_fallthru
      _
    // Predicated region
    $region6: #{tpu_custom_call.1} parent=1 // pred_check
      _
    $region7: #{tpu_custom_call.1} parent=1 // pred_check_branch
      %20 = sbr.rel (0) target = $region9
    $region8: #{tpu_custom_call.1} parent=1 // pred_region
      _
    $region9: #{tpu_custom_call.1} parent=1 // pred_fallthru
      _
    // Predicated region
    $region10: #{tpu_custom_call.1} parent=1 // pred_check
      _
    $region11: #{tpu_custom_call.1} parent=1 // pred_check_branch
      %22 = sbr.rel (0) target = $region13
    $region12: #{tpu_custom_call.1} parent=1 // pred_region
      %23 = dma.done [#allocation3], 128
    $region13: #{tpu_custom_call.1} parent=1 // pred_fallthru
      _
    %v24 = vld [vmem:[#allocation2] sm:$0xff]
    %v25 = vld [vmem:[%s1] sm:$0x1]
    %v27 = vlaneseq
    %v28 = vshrl.u32 %v27, 7
    %v29 = vsub.s32 0, %v28
    %v30 = vrot.slane %v25, %v29
    %v32 = vadd.f32 %v24, %v30
    %vm33 = vcmask 523264
    %34 = vst.msk [vmem:[#allocation5] sm:$0xff] %vm33, %v32
    // Predicated region
    $region14: #{tpu_custom_call.1} parent=1 // pred_check
      _
    $region15: #{tpu_custom_call.1} parent=1 // pred_check_branch
      %36 = sbr.rel (0) target = $region17
    $region16: #{tpu_custom_call.1} parent=1 // pred_region
      %s38 = ssub.s32 128, 128
      %39 = vsyncadd [#allocation4], %s38
      %s41 = sshll.u32 [#allocation5], 4
      %s42 = int_to_ptr.vmem [resolvable:$true] %s41
      %44 = dma.vmem_to_hbm [thread:$0]  %s42, 128, %s2, [#allocation4]
    $region17: #{tpu_custom_call.1} parent=1 // pred_fallthru
      _
    // Predicated region
    $region18: #{tpu_custom_call.1} parent=1 // pred_check
      _
    $region19: #{tpu_custom_call.1} parent=1 // pred_check_branch
      %46 = sbr.rel (0) target = $region21
    $region20: #{tpu_custom_call.1} parent=1 // pred_region
      %47 = dma.done [#allocation4], 128
    $region21: #{tpu_custom_call.1} parent=1 // pred_fallthru
      _
    %48 = vsyncpa [#allocation3], 1
    %49 = vsyncpa [#allocation4], 1

</llo_original>
